<compile_context>
chip_gen: v5e
topology: v5e:2x2
jax: 0.10.0
libtpu: 0.0.40
codegen_flags: <defaults>
</compile_context>

<pallas_src>
import functools
import jax
import jax.numpy as jnp
from jax.experimental import pallas as pl
from jax.experimental.pallas import tpu as pltpu

NEG_SLOPE = 0.01  # torch.nn.LeakyReLU default negative_slope


def _attention_kernel(h_ref, e_ref, w1_ref, b1_ref, w2_ref, b2_ref, o_ref, *, dh):
    # cat([h, e], -1) @ W1  ==  h @ W1[:Dh] + e @ W1[Dh:]  (concat folded away).
    # dh (=32) and de (=16) are multiples of 8, so these static row slices of the
    # VMEM-resident w1 tile are free views (no copy).
    z = (jnp.dot(h_ref[...], w1_ref[:dh, :], preferred_element_type=jnp.float32)
         + jnp.dot(e_ref[...], w1_ref[dh:, :], preferred_element_type=jnp.float32)
         + b1_ref[...])
    z = jnp.where(z >= 0.0, z, NEG_SLOPE * z)                    # LeakyReLU
    # Linear(H, 1): VPU multiply + XLU lane reduction (no 1-wide MXU matmul).
    # b2 is a scalar read from SMEM.
    o_ref[...] = jnp.sum(z * w2_ref[...], axis=-1, keepdims=True) + b2_ref[0]
    # TODO(synk): if N is ever tiled up, emit a lane-dense (1, N) output instead
    # of this (N, 1) column to avoid masked vst writeback.


def attention_forward(params, hidden_state, input_entries):
    """hidden_state: (N, Dh) f32, input_entries: (N, De) f32 -> (N,) f32."""
    N, dh = hidden_state.shape
    _, de = input_entries.shape
    H = params["b1"].shape[0]
    assert params["w1"].shape == (dh + de, H)

    out = pl.pallas_call(
        functools.partial(_attention_kernel, dh=dh),
        out_shape=jax.ShapeDtypeStruct((N, 1), jnp.float32),
        in_specs=[
            pl.BlockSpec(memory_space=pltpu.MemorySpace.VMEM),   # hidden_state (N, Dh)
            pl.BlockSpec(memory_space=pltpu.MemorySpace.VMEM),   # input_entries (N, De)
            pl.BlockSpec(memory_space=pltpu.MemorySpace.VMEM),   # w1 (Dh+De, H)
            pl.BlockSpec(memory_space=pltpu.MemorySpace.VMEM),   # b1 (1, H)
            pl.BlockSpec(memory_space=pltpu.MemorySpace.VMEM),   # w2 (1, H)
            pl.BlockSpec(memory_space=pltpu.MemorySpace.SMEM),   # b2 (1,) scalar
        ],
        out_specs=pl.BlockSpec(memory_space=pltpu.MemorySpace.VMEM),
    )(hidden_state, input_entries, params["w1"],
      params["b1"].reshape(1, H), params["w2"].reshape(1, H), params["b2"])
    return out.reshape(N)


# ---------------------------- parameter init ------------------------------------------
def init_params(key, input_len, hidden_dim):
    # NOTE: w1 is stored (in, out), i.e. the TRANSPOSE of torch.nn.Linear.weight
    # (out, in).  When loading real PyTorch weights use w1 = torch_w1.T; w2 keeps
    # torch's (1, H) layout.
    k1, k2, k3, k4 = jax.random.split(key, 4)
    w = lambda k, shape: (0.1 * jax.random.normal(k, shape)).astype(jnp.float32)
    return {
        "w1": w(k1, (input_len, hidden_dim)),   # (Dh+De, H)
        "b1": w(k2, (hidden_dim,)),
        "w2": w(k3, (1, hidden_dim)),           # torch Linear(H, 1).weight shape
        "b2": w(k4, (1,)),
    }


# ---------------------------- main -----------------------------------------------------
if __name__ == "__main__":
    key = jax.random.PRNGKey(0)
    pkey, hkey, ekey = jax.random.split(key, 3)

    N, DH, DE, HID = 8, 32, 16, 32              # seq=8, hidden_dim=32, input_len=48
    params = init_params(pkey, DH + DE, HID)

    hidden_state = jax.random.normal(hkey, (N, DH), dtype=jnp.float32)
    input_entries = jax.random.normal(ekey, (N, DE), dtype=jnp.float32)

    fwd = jax.jit(functools.partial(attention_forward, params))
    out = jax.block_until_ready(fwd(hidden_state, input_entries))

    # pure-JAX reference of the PyTorch forward (cat -> Linear -> LeakyReLU -> Linear -> squeeze)
    new_input = jnp.concatenate([hidden_state, input_entries], axis=-1)
    z = new_input @ params["w1"] + params["b1"]
    z = jnp.where(z >= 0.0, z, NEG_SLOPE * z)
    ref = (z @ params["w2"].T + params["b2"]).reshape(N)

    assert out.shape == (N,), out.shape
    assert out.dtype == jnp.float32
    assert bool(jnp.all(jnp.isfinite(out)))
    assert bool(jnp.allclose(out, ref, atol=1e-5, rtol=1e-5))
    print("KERNEL_OK")
</pallas_src>

<mosaic_0001>
module attributes {stable_mosaic.version = 11 : i64} {
  func.func @_attention_kernel(%arg0: memref<8x32xf32, #tpu.memory_space<vmem>>, %arg1: memref<8x16xf32, #tpu.memory_space<vmem>>, %arg2: memref<48x32xf32, #tpu.memory_space<vmem>>, %arg3: memref<1x32xf32, #tpu.memory_space<vmem>>, %arg4: memref<1x32xf32, #tpu.memory_space<vmem>>, %arg5: memref<1xf32, #tpu.memory_space<smem>>, %arg6: memref<8x1xf32, #tpu.memory_space<vmem>>) attributes {dimension_semantics = [], scalar_prefetch = 0 : i64, scratch_operands = 0 : i64, tpu.core_type = #tpu.core_type<tc>} {
    %c0 = arith.constant 0 : index
    %c0_0 = arith.constant 0 : index
    %0 = vector.load %arg0[%c0, %c0_0] : memref<8x32xf32, #tpu.memory_space<vmem>>, vector<8x32xf32>
    %c0_1 = arith.constant 0 : index
    %c0_2 = arith.constant 0 : index
    %1 = vector.load %arg2[%c0_1, %c0_2] : memref<48x32xf32, #tpu.memory_space<vmem>>, vector<32x32xf32>
    %cst = arith.constant dense<0.000000e+00> : vector<8x32xf32>
    %2 = tpu.matmul %0, %1, %cst {dimension_numbers = #tpu.dot_dimension_numbers<[1], [0], [0], [1], [0, 0, 1, 1], [], []>} : vector<8x32xf32>, vector<32x32xf32>, vector<8x32xf32> -> vector<8x32xf32>
    %c0_3 = arith.constant 0 : index
    %c0_4 = arith.constant 0 : index
    %3 = vector.load %arg1[%c0_3, %c0_4] : memref<8x16xf32, #tpu.memory_space<vmem>>, vector<8x16xf32>
    %c32 = arith.constant 32 : index
    %c0_5 = arith.constant 0 : index
    %4 = vector.load %arg2[%c32, %c0_5] : memref<48x32xf32, #tpu.memory_space<vmem>>, vector<16x32xf32>
    %cst_6 = arith.constant dense<0.000000e+00> : vector<8x32xf32>
    %5 = tpu.matmul %3, %4, %cst_6 {dimension_numbers = #tpu.dot_dimension_numbers<[1], [0], [0], [1], [0, 0, 1, 1], [], []>} : vector<8x16xf32>, vector<16x32xf32>, vector<8x32xf32> -> vector<8x32xf32>
    %6 = arith.addf %2, %5 : vector<8x32xf32>
    %c0_7 = arith.constant 0 : index
    %c0_8 = arith.constant 0 : index
    %7 = vector.load %arg3[%c0_7, %c0_8] : memref<1x32xf32, #tpu.memory_space<vmem>>, vector<1x32xf32>
    %8 = vector.broadcast %7 : vector<1x32xf32> to vector<8x32xf32>
    %9 = arith.addf %6, %8 : vector<8x32xf32>
    %cst_9 = arith.constant 0.000000e+00 : f32
    %10 = vector.broadcast %cst_9 : f32 to vector<8x32xf32>
    %11 = arith.cmpf oge, %9, %10 : vector<8x32xf32>
    %cst_10 = arith.constant 0.00999999977 : f32
    %12 = vector.broadcast %cst_10 : f32 to vector<8x32xf32>
    %13 = arith.mulf %12, %9 : vector<8x32xf32>
    %14 = arith.select %11, %9, %13 : vector<8x32xi1>, vector<8x32xf32>
    %c0_11 = arith.constant 0 : index
    %c0_12 = arith.constant 0 : index
    %15 = vector.load %arg4[%c0_11, %c0_12] : memref<1x32xf32, #tpu.memory_space<vmem>>, vector<1x32xf32>
    %16 = vector.broadcast %15 : vector<1x32xf32> to vector<8x32xf32>
    %17 = arith.mulf %14, %16 : vector<8x32xf32>
    %cst_13 = arith.constant dense<0.000000e+00> : vector<8xf32>
    %18 = vector.multi_reduction <add>, %17, %cst_13 [1] : vector<8x32xf32> to vector<8xf32>
    %19 = vector.shape_cast %18 : vector<8xf32> to vector<8x1xf32>
    %c0_14 = arith.constant 0 : index
    %20 = memref.load %arg5[%c0_14] : memref<1xf32, #tpu.memory_space<smem>>
    %21 = vector.broadcast %20 : f32 to vector<8x1xf32>
    %22 = arith.addf %19, %21 : vector<8x1xf32>
    %c0_15 = arith.constant 0 : index
    %c0_16 = arith.constant 0 : index
    %23 = vector.load %arg6[%c0_15, %c0_16] : memref<8x1xf32, #tpu.memory_space<vmem>>, vector<8x1xf32>
    tpu.vector_store %arg6[%c0_15, %c0_16], %22 {strides = array<i32>} : memref<8x1xf32, #tpu.memory_space<vmem>>, vector<8x1xf32>,
    return
  }
}

</mosaic_0001>

<llo_original>
// kernel: attention_forward.1
$region0: #{attention_forward.1}
  #allocation0 [shape = 'u32[]', space=smem, size = 0x4, offset = 0x4, fixed_abs, tag = 'smem constant byte address 0x4 - core index']
  #allocation1 [shape = 'u32[72,128]{1,0:T(1,128)}', space=vmem, size = 0x9000, scoped, tag = 'internal scratch']
  #allocation2 [shape = 'f32[1]{0:T(128)S(6)}', space=smem, size = 0x200, scoped, tag = 'scoped memory for attention_forward.1']
  %s0 = inlined_call_operand.hbm [shape: f32[8,32], index: 0, kind: input, shape index: {}]
  %s1 = inlined_call_operand.hbm [shape: f32[8,16], index: 1, kind: input, shape index: {}]
  %s2 = inlined_call_operand.hbm [shape: f32[48,32], index: 2, kind: input, shape index: {}]
  %s3 = inlined_call_operand.vmem [shape: f32[1,32], index: 3, kind: input, shape index: {}]
  %s4 = inlined_call_operand.vmem [shape: f32[1,32], index: 4, kind: input, shape index: {}]
  %s5 = inlined_call_operand.<no memory space> [shape: f32[1], index: 5, kind: input, shape index: {}]
  %s6 = inlined_call_operand.vmem [shape: f32[8,1], index: 6, kind: output, shape index: {}]
  %s7 = sld [smem:[#allocation0]]
  $region46: #{attention_forward.1} parent=0
    _
  %s9 = ssub.s32 1, %s7
  %s10 = scalar_select 0, %s9, %s7
  %11 = sst [smem:[#allocation2]] %s5
  $region1: #{attention_forward.1} parent=0
    #allocation3 [shape = 'u8[4096]{0}', space=vmem, size = 0x1000, scoped, tag = 'input window, operand 0, single buffered']
    #allocation4 [shape = 's32[1]{0}', space=sflag, size = 0x4, scoped, tag = 'scoped memory for attention_forward.1']
    #allocation5 [shape = 'u8[4096]{0}', space=vmem, size = 0x1000, scoped, tag = 'input window, operand 1, single buffered']
    #allocation6 [shape = 's32[1]{0}', space=sflag, size = 0x4, scoped, tag = 'scoped memory for attention_forward.1']
    #allocation7 [shape = 'u8[24576]{0}', space=vmem, size = 0x6000, scoped, tag = 'input window, operand 2, single buffered']
    %12 = vsyncpa [#allocation4], 0
    %13 = vsyncpa [#allocation6], 0
    // Predicated region
    $region2: #{attention_forward.1} parent=1 // pred_check
      _
    $region3: #{attention_forward.1} parent=1 // pred_check_branch
      %15 = sbr.rel (0) target = $region5
    $region4: #{attention_forward.1} parent=1 // pred_region
      %17 = vsyncadd [#allocation4], 0
      %s19 = sshll.u32 %s0, 4
      %s20 = int_to_ptr.hbm [resolvable:$true] %s19
      %s21 = sshll.u32 [#allocation3], 4
      %s22 = int_to_ptr.vmem [resolvable:$true] %s21
      %24 = dma.hbm_to_vmem [thread:$0]  %s20, 128, %s22, [#allocation4]
    $region5: #{attention_forward.1} parent=1 // pred_fallthru
      _
    // Predicated region
    $region6: #{attention_forward.1} parent=1 // pred_check
      _
    $region7: #{attention_forward.1} parent=1 // pred_check_branch
      %26 = sbr.rel (0) target = $region9
    $region8: #{attention_forward.1} parent=1 // pred_region
      %28 = vsyncadd [#allocation6], 0
      %s30 = sshll.u32 %s1, 4
      %s31 = int_to_ptr.hbm [resolvable:$true] %s30
      %s32 = sshll.u32 [#allocation5], 4
      %s33 = int_to_ptr.vmem [resolvable:$true] %s32
      %35 = dma.hbm_to_vmem [thread:$0]  %s31, 128, %s33, [#allocation6]
    $region9: #{attention_forward.1} parent=1 // pred_fallthru
      _
    // Predicated region
    $region10: #{attention_forward.1} parent=1 // pred_check
      _
    $region11: #{attention_forward.1} parent=1 // pred_check_branch
      %37 = sbr.rel (0) target = $region13
    $region12: #{attention_forward.1} parent=1 // pred_region
      %39 = vsyncadd [#allocation6], 0
      %s40 = sshll.u32 %s2, 4
      %s41 = int_to_ptr.hbm [resolvable:$true] %s40
      %s42 = sshll.u32 [#allocation7], 4
      %s43 = int_to_ptr.vmem [resolvable:$true] %s42
      %48 = dma.hbm_to_vmem [thread:$0]  %s41, 768, %s43, [#allocation6], 128, 128, 8
    $region13: #{attention_forward.1} parent=1 // pred_fallthru
      _
    // Predicated region
    $region14: #{attention_forward.1} parent=1 // pred_check
      _
    $region15: #{attention_forward.1} parent=1 // pred_check_branch
      %50 = sbr.rel (0) target = $region17
    $region16: #{attention_forward.1} parent=1 // pred_region
      _
    $region17: #{attention_forward.1} parent=1 // pred_fallthru
      _
    // Predicated region
    $region18: #{attention_forward.1} parent=1 // pred_check
      _
    $region19: #{attention_forward.1} parent=1 // pred_check_branch
      %52 = sbr.rel (0) target = $region21
    $region20: #{attention_forward.1} parent=1 // pred_region
      _
    $region21: #{attention_forward.1} parent=1 // pred_fallthru
      _
    // Predicated region
    $region22: #{attention_forward.1} parent=1 // pred_check
      _
    $region23: #{attention_forward.1} parent=1 // pred_check_branch
      %54 = sbr.rel (0) target = $region25
    $region24: #{attention_forward.1} parent=1 // pred_region
      _
    $region25: #{attention_forward.1} parent=1 // pred_fallthru
      _
    // Predicated region
    $region26: #{attention_forward.1} parent=1 // pred_check
      _
    $region27: #{attention_forward.1} parent=1 // pred_check_branch
      %56 = sbr.rel (0) target = $region29
    $region28: #{attention_forward.1} parent=1 // pred_region
      %58 = dma.done [#allocation4], 128
    $region29: #{attention_forward.1} parent=1 // pred_fallthru
      _
    // Predicated region
    $region30: #{attention_forward.1} parent=1 // pred_check
      _
    $region31: #{attention_forward.1} parent=1 // pred_check_branch
      %60 = sbr.rel (0) target = $region33
    $region32: #{attention_forward.1} parent=1 // pred_region
      %62 = dma.done [#allocation6], 128
    $region33: #{attention_forward.1} parent=1 // pred_fallthru
      _
    // Predicated region
    $region34: #{attention_forward.1} parent=1 // pred_check
      _
    $region35: #{attention_forward.1} parent=1 // pred_check_branch
      %64 = sbr.rel (0) target = $region37
    $region36: #{attention_forward.1} parent=1 // pred_region
      %66 = dma.done [#allocation6], 768
    $region37: #{attention_forward.1} parent=1 // pred_fallthru
      _
    %v67 = vld [vmem:[#allocation3] sm:$0xff]
    %v68 = vld [vmem:[#allocation7] sm:$0xff]
    %v69 = vld [vmem:[#allocation7 + $0x8] sm:$0xff]
    %v70 = vld [vmem:[#allocation7 + $0x10] sm:$0xff]
    %v71 = vld [vmem:[#allocation7 + $0x18] sm:$0xff]
    %v72 = vld [vmem:[#allocation5] sm:$0xff]
    %v73 = vld [vmem:[#allocation7 + $0x20] sm:$0xff]
    %v74 = vld [vmem:[#allocation7 + $0x28] sm:$0xff]
    %vm75 = vcmask 130048
    %v77 = vsel %vm75, %v72, 0
    %79 = vmatpush.msra.mxu0 0.0
    %80 = vmatpush.msra.mxu0 0.0
    %81 = vmatpush.msra.mxu0 0.0
    %82 = vmatpush.msra.mxu0 0.0
    %83 = vmatpush.msra.mxu0 0.0
    %84 = vmatpush.msra.mxu0 0.0
    %85 = vmatpush.msra.mxu0 0.0
    %86 = vmatpush.msra.mxu0 0.0
    %87 = vmatpush.msra.mxu0 0.0
    %88 = vmatpush.msra.mxu0 0.0
    %89 = vmatpush.msra.mxu0 0.0
    %90 = vmatpush.msra.mxu0 0.0
    %91 = vmatpush.msra.mxu0 0.0
    %92 = vmatpush.msra.mxu0 0.0
    %93 = vmatpush.msra.mxu0 %v74
    %94 = vmatpush.msra.mxu0 %v73
    %95 = vmatmul.f32.gmra.mxu0 %v77
    %v96 = vpop.f32.mrf.mxu0
    %v97 = vadd.f32 0.0, %v96
    %98 = vdwg.mxu0
    %vm99 = vcmask 261120
    %v101 = vsel %vm99, %v67, 0
    %103 = vmatpush.msra.mxu0 0.0
    %104 = vmatpush.msra.mxu0 0.0
    %105 = vmatpush.msra.mxu0 0.0
    %106 = vmatpush.msra.mxu0 0.0
    %107 = vmatpush.msra.mxu0 0.0
    %108 = vmatpush.msra.mxu0 0.0
    %109 = vmatpush.msra.mxu0 0.0
    %110 = vmatpush.msra.mxu0 0.0
    %111 = vmatpush.msra.mxu0 0.0
    %112 = vmatpush.msra.mxu0 0.0
    %113 = vmatpush.msra.mxu0 0.0
    %114 = vmatpush.msra.mxu0 0.0
    %115 = vmatpush.msra.mxu0 %v71
    %116 = vmatpush.msra.mxu0 %v70
    %117 = vmatpush.msra.mxu0 %v69
    %118 = vmatpush.msra.mxu0 %v68
    %119 = vmatmul.f32.gmra.mxu0 %v101
    %v120 = vpop.f32.mrf.mxu0
    %v121 = vadd.f32 %v97, %v120
    %122 = vdwg.mxu0
    %v123 = vld [vmem:[%s3] sm:$0x1]
    %v125 = vperm.slane %v123, 0
    %v127 = vadd.f32 %v121, %v125
    %vm128 = vcmp.ge.f32.partialorder %v127, 0.0
    %v129 = vmul.f32 %v127, 0.01
    %v130 = vsel %vm128, %v127, %v129
    %v131 = vld [vmem:[%s4] sm:$0x1]
    %v133 = vperm.slane %v131, 0
    %v135 = vmul.f32 %v130, %v133
    %v136 = vsel %vm99, %v135, 0.0
    %137 = vadd.xlane.f32.xlu0 %v136
    %v138 = vpop.xlane.xlu0 %137
    %s139 = sld [smem:[#allocation2]]
    %v140 = vstv %s139
    %v141 = vadd.f32 %v138, %v140
    %vm142 = vcmask 7168
    %143 = vst.msk [vmem:[%s6] sm:$0xff] %vm142, %v141
    // Predicated region
    $region38: #{attention_forward.1} parent=1 // pred_check
      _
    $region39: #{attention_forward.1} parent=1 // pred_check_branch
      %145 = sbr.rel (0) target = $region41
    $region40: #{attention_forward.1} parent=1 // pred_region
      _
    $region41: #{attention_forward.1} parent=1 // pred_fallthru
      _
    // Predicated region
    $region42: #{attention_forward.1} parent=1 // pred_check
      _
    $region43: #{attention_forward.1} parent=1 // pred_check_branch
      %147 = sbr.rel (0) target = $region45
    $region44: #{attention_forward.1} parent=1 // pred_region
      _
    $region45: #{attention_forward.1} parent=1 // pred_fallthru
      _
    %148 = vsyncpa [#allocation4], 1
    %149 = vsyncpa [#allocation6], 1

</llo_original>
